<compile_context>
chip_gen: v7x
topology: tpu7x:2x2x1
jax: 0.10.0
libtpu: 0.0.40
codegen_flags: <defaults>
</compile_context>

<pallas_src>
import functools
import math

import jax
import jax.numpy as jnp
from jax.experimental import pallas as pl
from jax.experimental.pallas import tpu as pltpu


# ----------------------------- kernels ------------------------------------


def _fc2d_kernel(w_ref, x_ref, o_ref):
    # w_ref: (F, F), x_ref: (F, tile_l) -> o_ref: (F, tile_l)
    o_ref[...] = jnp.dot(
        w_ref[...], x_ref[...], preferred_element_type=jnp.float32
    ).astype(o_ref.dtype)


def _fc2d_bias_kernel(w_ref, b_ref, x_ref, o_ref):
    acc = jnp.dot(w_ref[...], x_ref[...], preferred_element_type=jnp.float32)
    o_ref[...] = (acc + b_ref[...].astype(jnp.float32)).astype(o_ref.dtype)


def _fc3d_kernel(w_ref, x_ref, o_ref, *, bb):
    # x_ref/o_ref: (bb, F, tile_t); short static unroll over packed batch.
    for i in range(bb):
        o_ref[i, ...] = jnp.dot(
            w_ref[...], x_ref[i, ...], preferred_element_type=jnp.float32
        ).astype(o_ref.dtype)


def _fc3d_bias_kernel(w_ref, b_ref, x_ref, o_ref, *, bb):
    b = b_ref[...].astype(jnp.float32)  # (F, 1) broadcasts over lanes
    for i in range(bb):
        acc = jnp.dot(
            w_ref[...], x_ref[i, ...], preferred_element_type=jnp.float32
        )
        o_ref[i, ...] = (acc + b).astype(o_ref.dtype)


# ----------------------------- helpers -------------------------------------


def _vmem_budget_bytes() -> int:
    """~3/4 of physical VMEM (v5e/v6e: 128 MiB -> 96 MiB, v7x: 64 -> 48 MiB)."""
    try:
        cap = int(pltpu.get_tpu_info().vmem_capacity_bytes)
    except Exception:
        cap = 64 << 20  # conservative fallback (v7x-sized)
    return min((cap * 3) // 4, 96 << 20)


def _round_up(n: int, m: int) -> int:
    return ((n + m - 1) // m) * m


def _largest_divisor_leq(n: int, cap: int) -> int:
    cap = max(1, min(n, cap))
    for d in range(cap, 0, -1):
        if n % d == 0:
            return d
    return 1


# ----------------------------- wrapper --------------------------------------


def freq_fc(x: jax.Array, w: jax.Array, bias: jax.Array | None = None) -> jax.Array:
    """Pallas equivalent of Freq_FC(F_dim, bias).forward(x).

    x: (..., F, T); w: (F, F) in nn.Linear (out, in) layout; bias: (F,) or None.
    Returns (..., F, T) in x.dtype.
    """
    F_dim, T = int(x.shape[-2]), int(x.shape[-1])
    assert w.shape == (F_dim, F_dim), (w.shape, F_dim)

    dtype = x.dtype
    dsize = jnp.dtype(dtype).itemsize
    w = w.astype(dtype)
    if bias is not None:
        bias = bias.astype(dtype)

    lead = x.shape[:-2]
    B = math.prod(lead) if lead else 1
    x3 = x.reshape(B, F_dim, T)  # metadata-only

    # Zero-pad F to the sublane multiple (8 f32 / 16 bf16 / 32 int8) so the
    # (F, *) blocks need no internal relayout.  Padded rows/cols are zero and
    # sliced off the output; they contribute nothing to valid rows.
    sub = max(8, 32 // dsize)
    Fp = _round_up(F_dim, sub)
    if Fp != F_dim:
        pad_f = Fp - F_dim
        x3 = jnp.pad(x3, ((0, 0), (0, pad_f), (0, 0)))
        w = jnp.pad(w, ((0, pad_f), (0, pad_f)))
        if bias is not None:
            bias = jnp.pad(bias, (0, pad_f))

    # VMEM-budget-driven tile sizing: W (double-buffered) + in/out blocks
    # (double-buffered each) must fit under the budget.
    budget = _vmem_budget_bytes()
    w_bytes = 2 * Fp * Fp * dsize
    usable = max(budget - w_bytes - (1 << 20), 1 << 20)
    max_cols = max(128, usable // (4 * Fp * dsize))  # lane columns per step

    if T < 128:
        # -------- folded 2-D path (small T, e.g. the demo / short frames) ----
        # Fold batch into the lane axis:  out2 = W @ X2, X2[g, b*T+t] = x[b,g,t].
        # One-time wrapper transpose (layout plumbing) buys >=128-wide unmasked
        # stores and large DMAs; small problems collapse to one grid step.
        L = B * T
        x2 = jnp.transpose(x3, (1, 0, 2)).reshape(Fp, L)

        tile_l = min(L, 4096, max_cols)
        if tile_l < L:
            tile_l = max(128, (tile_l // 128) * 128)
        n_l = pl.cdiv(L, tile_l)

        in_specs = [pl.BlockSpec((Fp, Fp), lambda l: (0, 0))]  # W resident
        args = [w]
        if bias is not None:
            in_specs.append(pl.BlockSpec((Fp, 1), lambda l: (0, 0)))
            args.append(bias.reshape(Fp, 1))
            kernel = _fc2d_bias_kernel
        else:
            kernel = _fc2d_kernel
        in_specs.append(pl.BlockSpec((Fp, tile_l), lambda l: (0, l)))
        args.append(x2)

        out2 = pl.pallas_call(
            kernel,
            out_shape=jax.ShapeDtypeStruct((Fp, L), dtype),
            grid_spec=pltpu.PrefetchScalarGridSpec(
                num_scalar_prefetch=0,
                grid=(n_l,),
                in_specs=in_specs,
                out_specs=pl.BlockSpec((Fp, tile_l), lambda l: (0, l)),
            ),
            compiler_params=pltpu.CompilerParams(
                dimension_semantics=("parallel",),
                vmem_limit_bytes=int(budget),
            ),
        )(*args)

        out3 = jnp.transpose(out2.reshape(Fp, B, T)[:F_dim], (1, 0, 2))
        return out3.reshape(x.shape)

    # ------------- 3-D path (T >= 128): batch-packed lane-dense tiles --------
    tile_t = min(T, 4096, max_cols)
    if tile_t < T:
        tile_t = max(128, (tile_t // 128) * 128)
    n_t = pl.cdiv(T, tile_t)

    # Pack several batch slices per step so each block is multi-MiB even for
    # small F (cuts grid-step count; BB divides B so no ragged leading blocks).
    bb_cap = min(8, max(1, max_cols // tile_t), max(1, 2048 // tile_t))
    BB = _largest_divisor_leq(B, bb_cap)
    n_b = B // BB

    in_specs = [pl.BlockSpec((Fp, Fp), lambda b, t: (0, 0))]  # W resident
    args = [w]
    if bias is not None:
        in_specs.append(pl.BlockSpec((Fp, 1), lambda b, t: (0, 0)))
        args.append(bias.reshape(Fp, 1))
        kernel = functools.partial(_fc3d_bias_kernel, bb=BB)
    else:
        kernel = functools.partial(_fc3d_kernel, bb=BB)
    in_specs.append(pl.BlockSpec((BB, Fp, tile_t), lambda b, t: (b, 0, t)))
    args.append(x3)

    out3 = pl.pallas_call(
        kernel,
        out_shape=jax.ShapeDtypeStruct((B, Fp, T), dtype),
        grid_spec=pltpu.PrefetchScalarGridSpec(
            num_scalar_prefetch=0,
            grid=(n_b, n_t),
            in_specs=in_specs,
            out_specs=pl.BlockSpec((BB, Fp, tile_t), lambda b, t: (b, 0, t)),
        ),
        compiler_params=pltpu.CompilerParams(
            # Both axes independent (no reduction) -> v7x megacore can split.
            dimension_semantics=("parallel", "parallel"),
            vmem_limit_bytes=int(budget),
        ),
    )(*args)

    if Fp != F_dim:
        out3 = out3[:, :F_dim, :]
    return out3.reshape(x.shape)


# ------------------------------- demo ---------------------------------------


if __name__ == "__main__":
    key = jax.random.PRNGKey(0)
    kx, kw, kb, kx2 = jax.random.split(key, 4)

    # x = (batch, channels, F_dim, T) as the module's forward implies.
    x = jax.random.normal(kx, (2, 4, 32, 16), dtype=jnp.float32)
    w = jax.random.normal(kw, (32, 32), dtype=jnp.float32) * 0.1
    b = jax.random.normal(kb, (32,), dtype=jnp.float32) * 0.1

    ref = jnp.einsum("fg,...gt->...ft", w, x)

    # Module default: bias=False  (small-T folded path, single grid step).
    out = jax.block_until_ready(freq_fc(x, w))
    assert out.shape == x.shape and out.dtype == x.dtype
    assert float(jnp.max(jnp.abs(out - ref))) < 2e-4

    # Freq_FC(F_dim, bias=True).
    out_b = jax.block_until_ready(freq_fc(x, w, b))
    ref_b = ref + b[None, None, :, None]
    assert float(jnp.max(jnp.abs(out_b - ref_b))) < 2e-4

    # Larger-T path (3-D batch-packed tiles) with ragged F (padding path).
    F2, T2 = 36, 160
    x2 = jax.random.normal(kx2, (2, F2, T2), dtype=jnp.float32)
    w2 = jax.random.normal(kw, (F2, F2), dtype=jnp.float32) * 0.1
    b2 = jax.random.normal(kb, (F2,), dtype=jnp.float32) * 0.1
    ref2 = jnp.einsum("fg,bgt->bft", w2, x2) + b2[None, :, None]
    out2 = jax.block_until_ready(freq_fc(x2, w2, b2))
    assert out2.shape == x2.shape
    assert float(jnp.max(jnp.abs(out2 - ref2))) < 2e-4

    print("KERNEL_OK")
</pallas_src>

<mosaic_0001>
module attributes {stable_mosaic.version = 11 : i64} {
  func.func @_fc2d_kernel(%arg0: i32, %arg1: memref<32x32xf32, #tpu.memory_space<vmem>>, %arg2: memref<32x128xf32, #tpu.memory_space<vmem>>, %arg3: memref<32x128xf32, #tpu.memory_space<vmem>>) attributes {dimension_semantics = [#tpu.dimension_semantics<parallel>], iteration_bounds = array<i64: 1>, scalar_prefetch = 0 : i64, scratch_operands = 0 : i64, tpu.core_type = #tpu.core_type<tc>, window_params = [{pipeline_mode = #tpu.pipeline_mode<synchronous>, transform_indices = @transform_0, window_bounds = array<i64: 32, 32>}, {transform_indices = @transform_1, window_bounds = array<i64: 32, 128>}, {transform_indices = @transform_2, window_bounds = array<i64: 32, 128>}]} {
    %c0 = arith.constant 0 : index
    %c0_0 = arith.constant 0 : index
    %0 = vector.load %arg1[%c0, %c0_0] : memref<32x32xf32, #tpu.memory_space<vmem>>, vector<32x32xf32>
    %c0_1 = arith.constant 0 : index
    %c0_2 = arith.constant 0 : index
    %1 = vector.load %arg2[%c0_1, %c0_2] : memref<32x128xf32, #tpu.memory_space<vmem>>, vector<32x128xf32>
    %cst = arith.constant dense<0.000000e+00> : vector<32x128xf32>
    %2 = tpu.matmul %0, %1, %cst {dimension_numbers = #tpu.dot_dimension_numbers<[1], [0], [0], [1], [0, 0, 1, 1], [], []>} : vector<32x32xf32>, vector<32x128xf32>, vector<32x128xf32> -> vector<32x128xf32>
    %c0_3 = arith.constant 0 : index
    %c0_4 = arith.constant 0 : index
    %3 = vector.load %arg3[%c0_3, %c0_4] : memref<32x128xf32, #tpu.memory_space<vmem>>, vector<32x128xf32>
    tpu.vector_store %arg3[%c0_3, %c0_4], %2 {strides = array<i32>} : memref<32x128xf32, #tpu.memory_space<vmem>>, vector<32x128xf32>,
    return
  }
  func.func @transform_0(%arg0: i32) -> (i32, i32) {
    %c0_i32 = arith.constant 0 : i32
    %c0_i32_0 = arith.constant 0 : i32
    %c0_i32_1 = arith.constant 0 : i32
    return %c0_i32, %c0_i32_0 : i32, i32
  }
  func.func @transform_1(%arg0: i32) -> (i32, i32) {
    %c0_i32 = arith.constant 0 : i32
    %c0_i32_0 = arith.constant 0 : i32
    return %c0_i32, %arg0 : i32, i32
  }
  func.func @transform_2(%arg0: i32) -> (i32, i32) {
    %c0_i32 = arith.constant 0 : i32
    %c0_i32_0 = arith.constant 0 : i32
    return %c0_i32, %arg0 : i32, i32
  }
}

</mosaic_0001>

<llo_original>
// kernel: tpu_custom_call.1
$region0: #{tpu_custom_call.1}
  #allocation0 [shape = 'u32[]', space=smem, size = 0x4, offset = 0x4, fixed_abs, tag = 'smem constant byte address 0x4 - core index']
  #allocation1 [shape = 'u32[144,128]{1,0:T(1,128)}', space=vmem, size = 0x12000, scoped, tag = 'internal scratch']
  %s0 = inlined_call_operand.hbm [shape: f32[32,32], index: 0, kind: input, shape index: {}]
  %s1 = inlined_call_operand.hbm [shape: f32[32,128], index: 1, kind: input, shape index: {}]
  %s2 = inlined_call_operand.hbm [shape: f32[32,128], index: 2, kind: output, shape index: {}]
  %s3 = sld [smem:[#allocation0]]
  $region26: #{tpu_custom_call.1} parent=0
    _
  %s5 = ssub.s32 1, %s3
  %s6 = scalar_select 0, %s5, %s3
  $region1: #{tpu_custom_call.1} parent=0
    #allocation2 [shape = 'u8[16384]{0}', space=vmem, size = 0x4000, scoped, tag = 'input window, operand 0, single buffered']
    #allocation3 [shape = 's32[1]{0}', space=sflag, size = 0x4, scoped, tag = 'scoped memory for tpu_custom_call.1']
    #allocation4 [shape = 's32[1]{0}', space=sflag, size = 0x4, scoped, tag = 'scoped memory for tpu_custom_call.1']
    #allocation5 [shape = 'u8[16384]{0}', space=vmem, size = 0x4000, scoped, tag = 'input window, operand 1, single buffered']
    #allocation6 [shape = 's32[1]{0}', space=sflag, size = 0x4, scoped, tag = 'scoped memory for tpu_custom_call.1']
    #allocation7 [shape = 'u8[16384]{0}', space=vmem, size = 0x4000, scoped, tag = 'output window, operand 0, single buffered']
    %7 = vsyncpa [#allocation3], 0
    %8 = vsyncpa [#allocation6], 0
    %9 = vsyncpa [#allocation4], 0
    // Predicated region
    $region2: #{tpu_custom_call.1} parent=1 // pred_check
      _
    $region3: #{tpu_custom_call.1} parent=1 // pred_check_branch
      %11 = sbr.rel (0) target = $region5
    $region4: #{tpu_custom_call.1} parent=1 // pred_region
      %s13 = ssub.s32 512, 512
      %14 = vsyncadd [#allocation3], %s13
      %s15 = sshll.u32 [#allocation2], 4
      %s16 = int_to_ptr.vmem [resolvable:$true] %s15
      %21 = dma.hbm_to_vmem [thread:$0]  %s0, 512, %s16, [#allocation3], 128, 128, 8
    $region5: #{tpu_custom_call.1} parent=1 // pred_fallthru
      _
    // Predicated region
    $region6: #{tpu_custom_call.1} parent=1 // pred_check
      _
    $region7: #{tpu_custom_call.1} parent=1 // pred_check_branch
      %23 = sbr.rel (0) target = $region9
    $region8: #{tpu_custom_call.1} parent=1 // pred_region
      %s25 = ssub.s32 512, 512
      %26 = vsyncadd [#allocation6], %s25
      %s27 = sshll.u32 [#allocation5], 4
      %s28 = int_to_ptr.vmem [resolvable:$true] %s27
      %33 = dma.hbm_to_vmem [thread:$0]  %s1, 512, %s28, [#allocation6], 128, 128, 8
    $region9: #{tpu_custom_call.1} parent=1 // pred_fallthru
      _
    // Predicated region
    $region10: #{tpu_custom_call.1} parent=1 // pred_check
      _
    $region11: #{tpu_custom_call.1} parent=1 // pred_check_branch
      %35 = sbr.rel (0) target = $region13
    $region12: #{tpu_custom_call.1} parent=1 // pred_region
      %36 = dma.done [#allocation3], 512
    $region13: #{tpu_custom_call.1} parent=1 // pred_fallthru
      _
    // Predicated region
    $region14: #{tpu_custom_call.1} parent=1 // pred_check
      _
    $region15: #{tpu_custom_call.1} parent=1 // pred_check_branch
      %38 = sbr.rel (0) target = $region17
    $region16: #{tpu_custom_call.1} parent=1 // pred_region
      %39 = dma.done [#allocation6], 512
    $region17: #{tpu_custom_call.1} parent=1 // pred_fallthru
      _
    %v40 = vld [vmem:[#allocation2] sm:$0xff]
    %v41 = vld [vmem:[#allocation2 + $0x8] sm:$0xff]
    %v42 = vld [vmem:[#allocation2 + $0x10] sm:$0xff]
    %v43 = vld [vmem:[#allocation2 + $0x18] sm:$0xff]
    %v44 = vld [vmem:[#allocation5] sm:$0xff]
    %v45 = vld [vmem:[#allocation5 + $0x8] sm:$0xff]
    %v46 = vld [vmem:[#allocation5 + $0x10] sm:$0xff]
    %v47 = vld [vmem:[#allocation5 + $0x18] sm:$0xff]
    %vm48 = vcmask 261120
    %v50 = vsel %vm48, %v40, 0
    %v53 = vsel %vm48, %v41, 0
    %v56 = vsel %vm48, %v42, 0
    %v59 = vsel %vm48, %v43, 0
    %61 = vmatprep.subr.mxu0 0.0
    %62 = vmatpush1.msra.mxu0 %v44
    %63 = vmatprep.subr.mxu0 0.0
    %64 = vmatpush1.msra.mxu0 %v45
    %65 = vmatprep.subr.mxu0 0.0
    %66 = vmatpush1.msra.mxu0 %v46
    %67 = vmatprep.subr.mxu0 0.0
    %68 = vmatpush1.msra.mxu0 %v47
    %69 = vmatprep.subr.mxu0 0.0
    %70 = vmatpush1.msra.mxu0 0.0
    %71 = vmatprep.subr.mxu0 0.0
    %72 = vmatpush1.msra.mxu0 0.0
    %73 = vmatprep.subr.mxu0 0.0
    %74 = vmatpush1.msra.mxu0 0.0
    %75 = vmatprep.subr.mxu0 0.0
    %76 = vmatpush1.msra.mxu0 0.0
    %77 = vmatprep.subr.mxu0 0.0
    %78 = vmatpush1.msra.mxu0 0.0
    %79 = vmatprep.subr.mxu0 0.0
    %80 = vmatpush1.msra.mxu0 0.0
    %81 = vmatprep.subr.mxu0 0.0
    %82 = vmatpush1.msra.mxu0 0.0
    %83 = vmatprep.subr.mxu0 0.0
    %84 = vmatpush1.msra.mxu0 0.0
    %85 = vmatprep.subr.mxu0 0.0
    %86 = vmatpush1.msra.mxu0 0.0
    %87 = vmatprep.subr.mxu0 0.0
    %88 = vmatpush1.msra.mxu0 0.0
    %89 = vmatprep.subr.mxu0 0.0
    %90 = vmatpush1.msra.mxu0 0.0
    %91 = vmatprep.subr.mxu0 0.0
    %92 = vmatpush1.msra.mxu0 0.0
    %93 = vmatprep.subr.mxu0 0.0
    %94 = vmatpush1.msra.mxu0 0.0
    %95 = vmatprep.subr.mxu0 0.0
    %96 = vmatpush1.msra.mxu0 0.0
    %97 = vmatprep.subr.mxu0 0.0
    %98 = vmatpush1.msra.mxu0 0.0
    %99 = vmatprep.subr.mxu0 0.0
    %100 = vmatpush1.msra.mxu0 0.0
    %101 = vmatprep.subr.mxu0 0.0
    %102 = vmatpush1.msra.mxu0 0.0
    %103 = vmatprep.subr.mxu0 0.0
    %104 = vmatpush1.msra.mxu0 0.0
    %105 = vmatprep.subr.mxu0 0.0
    %106 = vmatpush1.msra.mxu0 0.0
    %107 = vmatprep.subr.mxu0 0.0
    %108 = vmatpush1.msra.mxu0 0.0
    %109 = vmatprep.subr.mxu0 0.0
    %110 = vmatpush1.msra.mxu0 0.0
    %111 = vmatprep.subr.mxu0 0.0
    %112 = vmatpush1.msra.mxu0 0.0
    %113 = vmatprep.subr.mxu0 0.0
    %114 = vmatpush1.msra.mxu0 0.0
    %115 = vmatprep.subr.mxu0 0.0
    %116 = vmatpush1.msra.mxu0 0.0
    %117 = vmatprep.subr.mxu0 0.0
    %118 = vmatpush1.msra.mxu0 0.0
    %119 = vmatprep.subr.mxu0 0.0
    %120 = vmatpush1.msra.mxu0 0.0
    %121 = vmatprep.subr.mxu0 0.0
    %122 = vmatpush1.msra.mxu0 0.0
    %123 = vmatprep.subr.mxu0 0.0
    %124 = vmatpush1.msra.mxu0 0.0
    %125 = vmatprep.mubr.f32.mxu0 0.0
    %126 = vmatmul.mubr.f32.gmra.mrb[0].mxu0 %v50
    %v127 = vpop.f32.mrb[0].mxu0
    %v128 = vadd.f32 0.0, %v127
    %v129 = vpop.f32.mrb[0].mxu0
    %130 = vmatprep.mubr.f32.mxu0 0.0
    %131 = vmatmul.mubr.f32.gmra.mrb[0].mxu0 %v53
    %v132 = vpop.f32.mrb[0].mxu0
    %v133 = vadd.f32 0.0, %v132
    %v134 = vpop.f32.mrb[0].mxu0
    %135 = vmatprep.mubr.f32.mxu0 0.0
    %136 = vmatmul.mubr.f32.gmra.mrb[0].mxu0 %v56
    %v137 = vpop.f32.mrb[0].mxu0
    %v138 = vadd.f32 0.0, %v137
    %v139 = vpop.f32.mrb[0].mxu0
    %140 = vmatprep.mubr.f32.mxu0 0.0
    %141 = vmatmul.mubr.f32.gmra.mrb[0].mxu0 %v59
    %v142 = vpop.f32.mrb[0].mxu0
    %v143 = vadd.f32 0.0, %v142
    %v144 = vpop.f32.mrb[0].mxu0
    %145 = vdwg.mxu0
    %146 = vst [vmem:[#allocation7] sm:$0xff] %v128
    %147 = vst [vmem:[#allocation7 + $0x8] sm:$0xff] %v133
    %148 = vst [vmem:[#allocation7 + $0x10] sm:$0xff] %v138
    %149 = vst [vmem:[#allocation7 + $0x18] sm:$0xff] %v143
    // Predicated region
    $region18: #{tpu_custom_call.1} parent=1 // pred_check
      _
    $region19: #{tpu_custom_call.1} parent=1 // pred_check_branch
      %151 = sbr.rel (0) target = $region21
    $region20: #{tpu_custom_call.1} parent=1 // pred_region
      %s153 = ssub.s32 512, 512
      %154 = vsyncadd [#allocation4], %s153
      %s155 = sshll.u32 [#allocation7], 4
      %s156 = int_to_ptr.vmem [resolvable:$true] %s155
      %161 = dma.vmem_to_hbm [thread:$0]  %s156, 512, %s2, [#allocation4], 128, 128, 8
    $region21: #{tpu_custom_call.1} parent=1 // pred_fallthru
      _
    // Predicated region
    $region22: #{tpu_custom_call.1} parent=1 // pred_check
      _
    $region23: #{tpu_custom_call.1} parent=1 // pred_check_branch
      %163 = sbr.rel (0) target = $region25
    $region24: #{tpu_custom_call.1} parent=1 // pred_region
      %164 = dma.done [#allocation4], 512
    $region25: #{tpu_custom_call.1} parent=1 // pred_fallthru
      _
    %165 = vsyncpa [#allocation3], 1
    %166 = vsyncpa [#allocation6], 1
    %167 = vsyncpa [#allocation4], 1

</llo_original>
